<compile_context>
chip_gen: v6e
topology: v6e:2x2x1
jax: 0.10.0
libtpu: 0.0.40
codegen_flags: <defaults>
</compile_context>

<pallas_src>
import functools

import jax
import jax.numpy as jnp
from jax.experimental import pallas as pl
from jax.experimental.pallas import tpu as pltpu


_SQRT_2_OVER_PI = 0.7978845608028654            # sqrt(2/pi)
_GELU_CUBIC = _SQRT_2_OVER_PI * 0.044715         # sqrt(2/pi) * 0.044715


def _gelu_tanh(x):
    """0.5*x*(1 + tanh(sqrt(2/pi)*(x + 0.044715*x^3))), minimal-VALU form."""
    dt = x.dtype
    a = jnp.asarray(_SQRT_2_OVER_PI, dt)
    b = jnp.asarray(_GELU_CUBIC, dt)
    half = jnp.asarray(0.5, dt)
    t = jnp.tanh(x * (a + b * x * x))   # tanh -> EUP (separate bundle slot)
    xh = half * x
    return xh + xh * t


# ----------------------------- kernels --------------------------------------


def _ffn_kernel_resident(x_ref, w1_ref, b1_ref, w2_ref, b2_ref, out_ref, *,
                         gelu_dtype):
    # x_ref:(TM,D)  w1_ref:(D,H)  b1_ref:(1,H)  w2_ref:(H,D)  b2_ref:(1,D)
    # Weights have constant index_maps -> DMA'd once, resident across M tiles.
    h = jnp.dot(x_ref[...], w1_ref[...], preferred_element_type=jnp.float32)
    h = _gelu_tanh(h.astype(gelu_dtype) + b1_ref[...])
    y = jnp.dot(h.astype(w2_ref.dtype), w2_ref[...],
                preferred_element_type=jnp.float32)
    out_ref[...] = (y + b2_ref[...]).astype(out_ref.dtype)


def _ffn_kernel_reduce(x_ref, w1_ref, b1_ref, w2_ref, b2_ref, out_ref, acc_ref,
                       *, gelu_dtype):
    # Hidden dim tiled as a reduction axis; acc_ref is an f32 VMEM accumulator.
    j = pl.program_id(1)

    @pl.when(j == 0)
    def _():
        acc_ref[...] = jnp.zeros_like(acc_ref)

    h = jnp.dot(x_ref[...], w1_ref[...], preferred_element_type=jnp.float32)
    h = _gelu_tanh(h.astype(gelu_dtype) + b1_ref[...])
    acc_ref[...] += jnp.dot(h.astype(w2_ref.dtype), w2_ref[...],
                            preferred_element_type=jnp.float32)

    @pl.when(j == pl.num_programs(1) - 1)
    def _():
        out_ref[...] = (acc_ref[...] + b2_ref[...]).astype(out_ref.dtype)


# --------------------------- host-side helpers -------------------------------


def _round_up(a, b):
    return (a + b - 1) // b * b


def _default_gelu_dtype(compute_dtype):
    if jnp.dtype(compute_dtype) == jnp.dtype(jnp.float32):
        return jnp.dtype(jnp.float32)
    try:
        kind = jax.devices()[0].device_kind.lower()
    except Exception:
        return jnp.dtype(jnp.float32)
    # v5e has no bf16 VPU/EUP: keep elementwise math in f32 there.
    if "v5 lite" in kind or "v5e" in kind or "v5lite" in kind:
        return jnp.dtype(jnp.float32)
    return jnp.dtype(compute_dtype)


def prepare_ffn_params(w1_pt, b1, w2_pt, b2, *, compute_dtype=jnp.bfloat16,
                       gelu_dtype=None):
    """One-time parameter prep (transpose / cast / pad) -- NOT the hot path.

    w1_pt: (H, D) PyTorch nn.Linear weight (out_features, in_features)
    b1:    (H,)
    w2_pt: (D, H)
    b2:    (D,)
    """
    compute_dtype = jnp.dtype(compute_dtype)
    if gelu_dtype is None:
        gelu_dtype = _default_gelu_dtype(compute_dtype)
    gelu_dtype = jnp.dtype(gelu_dtype)

    H, D = w1_pt.shape
    # Lane-dense layout: pad emb and hidden dims to multiples of 128 once here.
    # Zero padding is exact: padded W2 rows / W1 cols contribute nothing.
    Dp = _round_up(D, 128)
    Hp = _round_up(H, 128)

    w1 = jnp.asarray(w1_pt).T                                   # (D, H)
    w2 = jnp.asarray(w2_pt).T                                   # (H, D)
    w1 = jnp.pad(w1, ((0, Dp - D), (0, Hp - H))).astype(compute_dtype)
    w2 = jnp.pad(w2, ((0, Hp - H), (0, Dp - D))).astype(compute_dtype)
    b1p = jnp.pad(jnp.asarray(b1), (0, Hp - H)).astype(gelu_dtype).reshape(1, Hp)
    b2p = jnp.pad(jnp.asarray(b2), (0, Dp - D)).astype(jnp.float32).reshape(1, Dp)

    return dict(w1=w1, b1=b1p, w2=w2, b2=b2p, D=D, H=H, Dp=Dp, Hp=Hp,
                compute_dtype=compute_dtype, gelu_dtype=gelu_dtype)


def _pick_tm(M, block_m, row_align):
    """M tile: multiple of row_align; prefer one that divides M (no padding)."""
    if M <= block_m:
        return _round_up(M, row_align)
    fallback = _round_up(block_m, row_align)
    t = (block_m // row_align) * row_align
    floor = max(row_align, (block_m // 2 // row_align) * row_align)
    while t >= floor:
        if M % t == 0:
            return t
        t -= row_align
    return fallback


def feed_forward(x, params, *, block_m=512, block_h=512,
                 force_h_reduction=False,
                 weight_resident_budget_bytes=40 * 2**20):
    """y = gelu_tanh(x @ W1 + b1) @ W2 + b2, params from prepare_ffn_params."""
    orig_dtype = x.dtype
    *lead, D = x.shape
    assert D == params["D"], "embedding dim mismatch"
    Dp, Hp = params["Dp"], params["Hp"]
    compute_dtype = params["compute_dtype"]
    gelu_dtype = params["gelu_dtype"]

    M = 1
    for d in lead:
        M *= d
    x2 = x.reshape(M, D)
    if Dp != D:
        x2 = jnp.pad(x2, ((0, 0), (0, Dp - D)))
    x2 = x2.astype(compute_dtype)

    itemsize = compute_dtype.itemsize
    out_itemsize = jnp.dtype(orig_dtype).itemsize
    row_align = 16 if itemsize < 4 else 8          # bf16 sublane packing

    weight_bytes = 2 * Dp * Hp * itemsize
    resident = (not force_h_reduction) and (
        2 * weight_bytes <= weight_resident_budget_bytes)

    tm = _pick_tm(M, block_m, row_align)
    if resident and M > row_align:
        # Keep >=2 M tiles so the 'parallel' axis can feed both v7x TensorCores.
        cap = _round_up(-(-M // 2), row_align)
        if cap < tm:
            tm = _pick_tm(M, cap, row_align)
    m_pad = _round_up(M, tm)
    if m_pad != M:
        x2 = jnp.pad(x2, ((0, m_pad - M), (0, 0)))

    if resident:
        grid = (m_pad // tm,)
        in_specs = [
            pl.BlockSpec((tm, Dp), lambda i: (i, 0)),   # x tile
            pl.BlockSpec((Dp, Hp), lambda i: (0, 0)),   # W1 (resident)
            pl.BlockSpec((1, Hp), lambda i: (0, 0)),    # b1
            pl.BlockSpec((Hp, Dp), lambda i: (0, 0)),   # W2 (resident)
            pl.BlockSpec((1, Dp), lambda i: (0, 0)),    # b2
        ]
        out_spec = pl.BlockSpec((tm, Dp), lambda i: (i, 0))
        scratch = []
        kernel = functools.partial(_ffn_kernel_resident, gelu_dtype=gelu_dtype)
        dims = ("parallel",)
        vmem_need = (2 * weight_bytes
                     + 2 * tm * Dp * itemsize + 2 * tm * Dp * out_itemsize
                     + tm * Hp * 8)                     # hidden intermediate
    else:
        th = max(128, min((block_h // 128) * 128, Hp))
        while Hp % th != 0:
            th -= 128
        grid = (m_pad // tm, Hp // th)
        in_specs = [
            pl.BlockSpec((tm, Dp), lambda i, j: (i, 0)),
            pl.BlockSpec((Dp, th), lambda i, j: (0, j)),
            pl.BlockSpec((1, th), lambda i, j: (0, j)),
            pl.BlockSpec((th, Dp), lambda i, j: (j, 0)),
            pl.BlockSpec((1, Dp), lambda i, j: (0, 0)),
        ]
        out_spec = pl.BlockSpec((tm, Dp), lambda i, j: (i, 0))
        scratch = [pltpu.VMEM((tm, Dp), jnp.float32)]
        kernel = functools.partial(_ffn_kernel_reduce, gelu_dtype=gelu_dtype)
        dims = ("parallel", "arbitrary")
        vmem_need = (4 * Dp * th * itemsize
                     + 2 * tm * Dp * itemsize + 2 * tm * Dp * out_itemsize
                     + tm * Dp * 4 + tm * th * 8)

    # Raise scoped VMEM above the 16/32 MiB default when needed; cap at 64 MiB
    # so the same setting stays safe on v7x (v5e/v6e can raise further).
    vmem_limit = int(min(64 * 2**20, max(32 * 2**20, int(vmem_need * 1.5))))

    out = pl.pallas_call(
        kernel,
        out_shape=jax.ShapeDtypeStruct((m_pad, Dp), orig_dtype),
        grid_spec=pltpu.PrefetchScalarGridSpec(
            num_scalar_prefetch=0,
            grid=grid,
            in_specs=in_specs,
            out_specs=out_spec,
            scratch_shapes=scratch,
        ),
        compiler_params=pltpu.CompilerParams(
            dimension_semantics=dims,
            vmem_limit_bytes=vmem_limit),
    )(x2, params["w1"], params["b1"], params["w2"], params["b2"])

    if m_pad != M or Dp != D:
        out = out[:M, :D]
    return out.reshape(*lead, D)


# ------------------------------- demo / test ---------------------------------


if __name__ == "__main__":
    cfg = {"emb_dim": 128}
    D = cfg["emb_dim"]
    H = 4 * D
    B, T = 2, 8

    key = jax.random.PRNGKey(0)
    k_x, k_w1, k_b1, k_w2, k_b2 = jax.random.split(key, 5)

    x = jax.random.normal(k_x, (B, T, D), dtype=jnp.float32)

    # PyTorch nn.Linear layout: (out_features, in_features).
    w1_pt = jax.random.normal(k_w1, (H, D), dtype=jnp.float32) * 0.02
    b1 = jax.random.normal(k_b1, (H,), dtype=jnp.float32) * 0.02
    w2_pt = jax.random.normal(k_w2, (D, H), dtype=jnp.float32) * 0.02
    b2 = jax.random.normal(k_b2, (D,), dtype=jnp.float32) * 0.02

    # Pure-JAX f32 reference (matches the PyTorch module's tanh-approx GELU).
    def ref_fn(xx):
        h = xx @ w1_pt.T + b1
        h = 0.5 * h * (1.0 + jnp.tanh(jnp.sqrt(2.0 / jnp.pi)
                                      * (h + 0.044715 * h ** 3)))
        return h @ w2_pt.T + b2

    ref = ref_fn(x)

    # One-time parameter prep (transpose / cast / pad hoisted out of hot path).
    params_f32 = prepare_ffn_params(w1_pt, b1, w2_pt, b2,
                                    compute_dtype=jnp.float32)
    params_bf16 = prepare_ffn_params(w1_pt, b1, w2_pt, b2,
                                     compute_dtype=jnp.bfloat16)

    # f32 weight-resident fast path.
    out_f32 = jax.block_until_ready(feed_forward(x, params_f32))
    assert out_f32.shape == (B, T, D)
    assert jnp.allclose(out_f32, ref, atol=1e-3, rtol=1e-3), "f32 resident path"

    # f32 H-reduction path (exercises the accumulator kernel).
    out_red = jax.block_until_ready(
        feed_forward(x, params_f32, block_h=128, force_h_reduction=True))
    assert jnp.allclose(out_red, ref, atol=1e-3, rtol=1e-3), "f32 reduction path"

    # bf16 default inference path (looser tolerance vs the f32 reference).
    out_bf16 = jax.block_until_ready(feed_forward(x, params_bf16))
    assert out_bf16.shape == (B, T, D)
    assert jnp.allclose(out_bf16, ref, atol=3e-2, rtol=3e-2), "bf16 path"

    print("KERNEL_OK")
</pallas_src>

<mosaic_0001>
module attributes {stable_mosaic.version = 11 : i64} {
  func.func @_ffn_kernel_resident(%arg0: i32, %arg1: memref<8x128xf32, #tpu.memory_space<vmem>>, %arg2: memref<128x512xf32, #tpu.memory_space<vmem>>, %arg3: memref<1x512xf32, #tpu.memory_space<vmem>>, %arg4: memref<512x128xf32, #tpu.memory_space<vmem>>, %arg5: memref<1x128xf32, #tpu.memory_space<vmem>>, %arg6: memref<8x128xf32, #tpu.memory_space<vmem>>) attributes {dimension_semantics = [#tpu.dimension_semantics<parallel>], iteration_bounds = array<i64: 2>, scalar_prefetch = 0 : i64, scratch_operands = 0 : i64, tpu.core_type = #tpu.core_type<tc>, window_params = [{transform_indices = @transform_0, window_bounds = array<i64: 8, 128>}, {pipeline_mode = #tpu.pipeline_mode<synchronous>, transform_indices = @transform_1, window_bounds = array<i64: 128, 512>}, {pipeline_mode = #tpu.pipeline_mode<synchronous>, transform_indices = @transform_2, window_bounds = array<i64: 1, 512>}, {pipeline_mode = #tpu.pipeline_mode<synchronous>, transform_indices = @transform_3, window_bounds = array<i64: 512, 128>}, {pipeline_mode = #tpu.pipeline_mode<synchronous>, transform_indices = @transform_4, window_bounds = array<i64: 1, 128>}, {transform_indices = @transform_5, window_bounds = array<i64: 8, 128>}]} {
    %c0 = arith.constant 0 : index
    %c0_0 = arith.constant 0 : index
    %0 = vector.load %arg1[%c0, %c0_0] : memref<8x128xf32, #tpu.memory_space<vmem>>, vector<8x128xf32>
    %c0_1 = arith.constant 0 : index
    %c0_2 = arith.constant 0 : index
    %1 = vector.load %arg2[%c0_1, %c0_2] : memref<128x512xf32, #tpu.memory_space<vmem>>, vector<128x512xf32>
    %cst = arith.constant dense<0.000000e+00> : vector<8x512xf32>
    %2 = tpu.matmul %0, %1, %cst {dimension_numbers = #tpu.dot_dimension_numbers<[1], [0], [0], [1], [0, 0, 1, 1], [], []>} : vector<8x128xf32>, vector<128x512xf32>, vector<8x512xf32> -> vector<8x512xf32>
    %c0_3 = arith.constant 0 : index
    %c0_4 = arith.constant 0 : index
    %3 = vector.load %arg3[%c0_3, %c0_4] : memref<1x512xf32, #tpu.memory_space<vmem>>, vector<1x512xf32>
    %4 = vector.broadcast %3 : vector<1x512xf32> to vector<8x512xf32>
    %5 = arith.addf %2, %4 : vector<8x512xf32>
    %cst_5 = arith.constant 0.0356774069 : f32
    %6 = vector.broadcast %cst_5 : f32 to vector<8x512xf32>
    %7 = arith.mulf %6, %5 : vector<8x512xf32>
    %8 = arith.mulf %7, %5 : vector<8x512xf32>
    %cst_6 = arith.constant 0.797884583 : f32
    %9 = vector.broadcast %cst_6 : f32 to vector<8x512xf32>
    %10 = arith.addf %9, %8 : vector<8x512xf32>
    %11 = arith.mulf %5, %10 : vector<8x512xf32>
    %12 = math.tanh %11 : vector<8x512xf32>
    %cst_7 = arith.constant 5.000000e-01 : f32
    %13 = vector.broadcast %cst_7 : f32 to vector<8x512xf32>
    %14 = arith.mulf %13, %5 : vector<8x512xf32>
    %15 = arith.mulf %14, %12 : vector<8x512xf32>
    %16 = arith.addf %14, %15 : vector<8x512xf32>
    %c0_8 = arith.constant 0 : index
    %c0_9 = arith.constant 0 : index
    %17 = vector.load %arg4[%c0_8, %c0_9] : memref<512x128xf32, #tpu.memory_space<vmem>>, vector<512x128xf32>
    %cst_10 = arith.constant dense<0.000000e+00> : vector<8x128xf32>
    %18 = tpu.matmul %16, %17, %cst_10 {dimension_numbers = #tpu.dot_dimension_numbers<[1], [0], [0], [1], [0, 0, 1, 1], [], []>} : vector<8x512xf32>, vector<512x128xf32>, vector<8x128xf32> -> vector<8x128xf32>
    %c0_11 = arith.constant 0 : index
    %c0_12 = arith.constant 0 : index
    %19 = vector.load %arg5[%c0_11, %c0_12] : memref<1x128xf32, #tpu.memory_space<vmem>>, vector<1x128xf32>
    %20 = vector.broadcast %19 : vector<1x128xf32> to vector<8x128xf32>
    %21 = arith.addf %18, %20 : vector<8x128xf32>
    %c0_13 = arith.constant 0 : index
    %c0_14 = arith.constant 0 : index
    %22 = vector.load %arg6[%c0_13, %c0_14] : memref<8x128xf32, #tpu.memory_space<vmem>>, vector<8x128xf32>
    tpu.vector_store %arg6[%c0_13, %c0_14], %21 {strides = array<i32>} : memref<8x128xf32, #tpu.memory_space<vmem>>, vector<8x128xf32>,
    return
  }
  func.func @transform_0(%arg0: i32) -> (i32, i32) {
    %c0_i32 = arith.constant 0 : i32
    %c0_i32_0 = arith.constant 0 : i32
    return %arg0, %c0_i32 : i32, i32
  }
  func.func @transform_1(%arg0: i32) -> (i32, i32) {
    %c0_i32 = arith.constant 0 : i32
    %c0_i32_0 = arith.constant 0 : i32
    %c0_i32_1 = arith.constant 0 : i32
    return %c0_i32, %c0_i32_0 : i32, i32
  }
  func.func @transform_2(%arg0: i32) -> (i32, i32) {
    %c0_i32 = arith.constant 0 : i32
    %c0_i32_0 = arith.constant 0 : i32
    %c0_i32_1 = arith.constant 0 : i32
    return %c0_i32, %c0_i32_0 : i32, i32
  }
  func.func @transform_3(%arg0: i32) -> (i32, i32) {
    %c0_i32 = arith.constant 0 : i32
    %c0_i32_0 = arith.constant 0 : i32
    %c0_i32_1 = arith.constant 0 : i32
    return %c0_i32, %c0_i32_0 : i32, i32
  }
  func.func @transform_4(%arg0: i32) -> (i32, i32) {
    %c0_i32 = arith.constant 0 : i32
    %c0_i32_0 = arith.constant 0 : i32
    %c0_i32_1 = arith.constant 0 : i32
    return %c0_i32, %c0_i32_0 : i32, i32
  }
  func.func @transform_5(%arg0: i32) -> (i32, i32) {
    %c0_i32 = arith.constant 0 : i32
    %c0_i32_0 = arith.constant 0 : i32
    return %arg0, %c0_i32 : i32, i32
  }
}

</mosaic_0001>

<llo_original>
// kernel: tpu_custom_call.1
$region0: #{tpu_custom_call.1}
  #allocation0 [shape = 'u32[]', space=smem, size = 0x4, offset = 0x4, fixed_abs, tag = 'smem constant byte address 0x4 - core index']
  #allocation1 [shape = 'u32[144,128]{1,0:T(1,128)}', space=vmem, size = 0x12000, scoped, tag = 'internal scratch']
  %s0 = inlined_call_operand.hbm [shape: f32[16,128], index: 0, kind: input, shape index: {}]
  %s1 = inlined_call_operand.hbm [shape: f32[128,512], index: 1, kind: input, shape index: {}]
  %s2 = inlined_call_operand.hbm [shape: f32[1,512], index: 2, kind: input, shape index: {}]
  %s3 = inlined_call_operand.hbm [shape: f32[512,128], index: 3, kind: input, shape index: {}]
  %s4 = inlined_call_operand.vmem [shape: f32[1,128], index: 4, kind: input, shape index: {}]
  %s5 = inlined_call_operand.hbm [shape: f32[16,128], index: 5, kind: output, shape index: {}]
  %s6 = sld [smem:[#allocation0]]
  $region69: #{tpu_custom_call.1} parent=0
    _
  %s8 = ssub.s32 1, %s6
  %s9 = scalar_select 0, %s8, %s6
  $region1: #{tpu_custom_call.1} parent=0
    #allocation2 [shape = 'u8[8192]{0}', space=vmem, size = 0x2000, scoped, tag = 'input window, operand 0']
    #allocation3 [shape = 's32[2]{0}', space=sflag, size = 0x8, scoped, tag = 'scoped memory for tpu_custom_call.1']
    #allocation4 [shape = 's32[2]{0}', space=sflag, size = 0x8, scoped, tag = 'scoped memory for tpu_custom_call.1']
    #allocation5 [shape = 'u8[262144]{0}', space=vmem, size = 0x40000, scoped, tag = 'input window, operand 1, single buffered']
    #allocation6 [shape = 's32[1]{0}', space=sflag, size = 0x4, scoped, tag = 'scoped memory for tpu_custom_call.1']
    #allocation7 [shape = 'u8[2048]{0}', space=vmem, size = 0x800, scoped, tag = 'input window, operand 2, single buffered']
    #allocation8 [shape = 'u8[262144]{0}', space=vmem, size = 0x40000, scoped, tag = 'input window, operand 3, single buffered']
    #allocation9 [shape = 's32[1]{0}', space=sflag, size = 0x4, scoped, tag = 'scoped memory for tpu_custom_call.1']
    #allocation10 [shape = 'u8[8192]{0}', space=vmem, size = 0x2000, scoped, tag = 'output window, operand 0']
    %10 = vsyncpa [#allocation3], 0
    %s11 = scalar_lea.sflag [#allocation3], 1
    %12 = vsyncpa %s11, 0
    %13 = vsyncpa [#allocation6], 0
    %14 = vsyncpa [#allocation9], 0
    %15 = vsyncpa [#allocation4], 0
    %s16 = scalar_lea.sflag [#allocation4], 1
    %17 = vsyncpa %s16, 0
    loop: start=0, step=1, limit=4
    $region2: #{tpu_custom_call.1} parent=1 // loop_pre_header
      _
    $region3: #{tpu_custom_call.1} parent=1 // loop_header
      %s19 = sphi 0, %s23
      %p20 = scmp.ge.s32.totalorder %s19, 4
      %s29 = sphi 0, %s31
      %s32 = sphi 0, %s29
      %s33 = sphi 0, %s32
      %s49 = sphi 0, %s33
      %s53 = sphi 0, %s53
      %s55 = sphi 0, %s53
      %s56 = sphi 0, %s55
      %s70 = sphi 0, %s56
      %s74 = sphi 0, %s74
      %s76 = sphi 0, %s74
      %s77 = sphi 0, %s76
      %s91 = sphi 0, %s77
      %s95 = sphi 0, %s95
      %s97 = sphi 0, %s95
      %s98 = sphi 0, %s97
      %s112 = sphi 0, %s98
      %s116 = sphi 0, %s116
      %s118 = sphi 0, %s116
      %s119 = sphi 0, %s118
      %s133 = sphi 0, %s119
      %s139 = sphi 0, %s141
      %s142 = sphi 0, %s139
      %s143 = sphi 0, %s142
      %s159 = sphi 0, %s143
    $region4: #{tpu_custom_call.1} parent=1 // loop_header_branch
      %22 = sbr.rel (%p20) target = $region8
    $region5: #{tpu_custom_call.1} parent=1 // loop_body
      %s24 = ssub.s32 %s19, 1
      %s25 = ssub.s32 %s19, 2
      %s26 = sadd.s32 %s19, 1
      %s27 = ssub.s32 %s19, %s26
      %p28 = scmp.eq.s32.totalorder %s27, 0
      %s30 = sadd.s32 %s29, 1
      %s31 = scalar_select %p28, %s29, %s30
      %p34 = pneg %p28
      %p35 = scmp.eq.s32.totalorder %s19, 1
      %p36 = por %p34, %p35
      %p37 = scmp.ne.s32.totalorder %s29, %s32
      %p38 = scmp.eq.s32.totalorder %s19, 0
      %p39 = por %p37, %p38
      %p40 = scmp.ne.s32.totalorder %s29, %s32
      %p41 = scmp.eq.s32.totalorder %s24, 1
      %p42 = por %p40, %p41
      %p43 = scmp.ne.s32.totalorder %s32, %s33
      %p44 = scmp.eq.s32.totalorder %s24, 0
      %p45 = por %p43, %p44
      %p46 = scmp.ne.s32.totalorder %s32, %s33
      %p47 = scmp.eq.s32.totalorder %s25, 1
      %p48 = por %p46, %p47
      %p50 = scmp.ne.s32.totalorder %s33, %s49
      %p51 = scmp.eq.s32.totalorder %s25, 0
      %p52 = por %p50, %p51
      %s54 = sadd.s32 %s53, 1
      %p57 = scmp.eq.s32.totalorder %s19, 1
      %p58 = scmp.ne.s32.totalorder %s53, %s55
      %p59 = scmp.eq.s32.totalorder %s19, 0
      %p60 = por %p58, %p59
      %p61 = scmp.ne.s32.totalorder %s53, %s55
      %p62 = scmp.eq.s32.totalorder %s24, 1
      %p63 = por %p61, %p62
      %p64 = scmp.ne.s32.totalorder %s55, %s56
      %p65 = scmp.eq.s32.totalorder %s24, 0
      %p66 = por %p64, %p65
      %p67 = scmp.ne.s32.totalorder %s55, %s56
      %p68 = scmp.eq.s32.totalorder %s25, 1
      %p69 = por %p67, %p68
      %p71 = scmp.ne.s32.totalorder %s56, %s70
      %p72 = scmp.eq.s32.totalorder %s25, 0
      %p73 = por %p71, %p72
      %s75 = sadd.s32 %s74, 1
      %p78 = scmp.eq.s32.totalorder %s19, 1
      %p79 = scmp.ne.s32.totalorder %s74, %s76
      %p80 = scmp.eq.s32.totalorder %s19, 0
      %p81 = por %p79, %p80
      %p82 = scmp.ne.s32.totalorder %s74, %s76
      %p83 = scmp.eq.s32.totalorder %s24, 1
      %p84 = por %p82, %p83
      %p85 = scmp.ne.s32.totalorder %s76, %s77
      %p86 = scmp.eq.s32.totalorder %s24, 0
      %p87 = por %p85, %p86
      %p88 = scmp.ne.s32.totalorder %s76, %s77
      %p89 = scmp.eq.s32.totalorder %s25, 1
      %p90 = por %p88, %p89
      %p92 = scmp.ne.s32.totalorder %s77, %s91
      %p93 = scmp.eq.s32.totalorder %s25, 0
      %p94 = por %p92, %p93
      %s96 = sadd.s32 %s95, 1
      %p99 = scmp.eq.s32.totalorder %s19, 1
      %p100 = scmp.ne.s32.totalorder %s95, %s97
      %p101 = scmp.eq.s32.totalorder %s19, 0
      %p102 = por %p100, %p101
      %p103 = scmp.ne.s32.totalorder %s95, %s97
      %p104 = scmp.eq.s32.totalorder %s24, 1
      %p105 = por %p103, %p104
      %p106 = scmp.ne.s32.totalorder %s97, %s98
      %p107 = scmp.eq.s32.totalorder %s24, 0
      %p108 = por %p106, %p107
      %p109 = scmp.ne.s32.totalorder %s97, %s98
      %p110 = scmp.eq.s32.totalorder %s25, 1
      %p111 = por %p109, %p110
      %p113 = scmp.ne.s32.totalorder %s98, %s112
      %p114 = scmp.eq.s32.totalorder %s25, 0
      %p115 = por %p113, %p114
      %s117 = sadd.s32 %s116, 1
      %p120 = scmp.eq.s32.totalorder %s19, 1
      %p121 = scmp.ne.s32.totalorder %s116, %s118
      %p122 = scmp.eq.s32.totalorder %s19, 0
      %p123 = por %p121, %p122
      %p124 = scmp.ne.s32.totalorder %s116, %s118
      %p125 = scmp.eq.s32.totalorder %s24, 1
      %p126 = por %p124, %p125
      %p127 = scmp.ne.s32.totalorder %s118, %s119
      %p128 = scmp.eq.s32.totalorder %s24, 0
      %p129 = por %p127, %p128
      %p130 = scmp.ne.s32.totalorder %s118, %s119
      %p131 = scmp.eq.s32.totalorder %s25, 1
      %p132 = por %p130, %p131
      %p134 = scmp.ne.s32.totalorder %s119, %s133
      %p135 = scmp.eq.s32.totalorder %s25, 0
      %p136 = por %p134, %p135
      %s137 = ssub.s32 %s19, %s26
      %p138 = scmp.eq.s32.totalorder %s137, 0
      %s140 = sadd.s32 %s139, 1
      %s141 = scalar_select %p138, %s139, %s140
      %p144 = pneg %p138
      %p145 = scmp.eq.s32.totalorder %s19, 1
      %p146 = por %p144, %p145
      %p147 = scmp.ne.s32.totalorder %s139, %s142
      %p148 = scmp.eq.s32.totalorder %s19, 0
      %p149 = por %p147, %p148
      %p150 = scmp.ne.s32.totalorder %s139, %s142
      %p151 = scmp.eq.s32.totalorder %s24, 1
      %p152 = por %p150, %p151
      %p153 = scmp.ne.s32.totalorder %s142, %s143
      %p154 = scmp.eq.s32.totalorder %s24, 0
      %p155 = por %p153, %p154
      %p156 = scmp.ne.s32.totalorder %s142, %s143
      %p157 = scmp.eq.s32.totalorder %s25, 1
      %p158 = por %p156, %p157
      %p160 = scmp.ne.s32.totalorder %s143, %s159
      %p161 = scmp.eq.s32.totalorder %s25, 0
      %p162 = por %p160, %p161
      %p163 = scmp.le.s32.totalorder 1, %s19
      %p164 = scmp.lt.s32.totalorder %s19, 3
      %p165 = pnand %p163, %p164
      %p166 = pneg %p165
      // Predicated region
      $region9: #{tpu_custom_call.1} parent=5 // pred_check
        _
      $region10: #{tpu_custom_call.1} parent=5 // pred_check_branch
        %168 = sbr.rel (%p165) target = $region12
      $region11: #{tpu_custom_call.1} parent=5 // pred_region
        %s169 = ssub.s32 %s19, 1
        // Predicated region
        $region13: #{tpu_custom_call.1} parent=11 // pred_check
          %p170 = pneg %p66
        $region14: #{tpu_custom_call.1} parent=11 // pred_check_branch
          %172 = sbr.rel (%p170) target = $region16
        $region15: #{tpu_custom_call.1} parent=11 // pred_region
          %s174 = ssub.s32 8192, 8192
          %175 = vsyncadd [#allocation6], %s174
          %s176 = sshll.u32 [#allocation5], 4
          %s177 = int_to_ptr.vmem [resolvable:$true] %s176
          %182 = dma.hbm_to_vmem [thread:$0]  %s1, 8192, %s177, [#allocation6], 512, 512, 32
        $region16: #{tpu_custom_call.1} parent=11 // pred_fallthru
          _
        // Predicated region
        $region17: #{tpu_custom_call.1} parent=11 // pred_check
          %p183 = pneg %p87
        $region18: #{tpu_custom_call.1} parent=11 // pred_check_branch
          %185 = sbr.rel (%p183) target = $region20
        $region19: #{tpu_custom_call.1} parent=11 // pred_region
          %s187 = ssub.s32 64, 64
          %188 = vsyncadd [#allocation6], %s187
          %s190 = sshll.u32 [#allocation7], 4
          %s191 = int_to_ptr.vmem [resolvable:$true] %s190
          %193 = dma.hbm_to_vmem [thread:$0]  %s2, 64, %s191, [#allocation6]
        $region20: #{tpu_custom_call.1} parent=11 // pred_fallthru
          _
        // Predicated region
        $region21: #{tpu_custom_call.1} parent=11 // pred_check
          %p194 = pneg %p108
        $region22: #{tpu_custom_call.1} parent=11 // pred_check_branch
          %196 = sbr.rel (%p194) target = $region24
        $region23: #{tpu_custom_call.1} parent=11 // pred_region
          %s198 = ssub.s32 8192, 8192
          %199 = vsyncadd [#allocation9], %s198
          %s200 = sshll.u32 [#allocation8], 4
          %s201 = int_to_ptr.vmem [resolvable:$true] %s200
          %206 = dma.hbm_to_vmem [thread:$0]  %s3, 8192, %s201, [#allocation9], 128, 128, 8
        $region24: #{tpu_custom_call.1} parent=11 // pred_fallthru
          _
        // Predicated region
        $region25: #{tpu_custom_call.1} parent=11 // pred_check
          %p207 = pneg %p129
        $region26: #{tpu_custom_call.1} parent=11 // pred_check_branch
          %209 = sbr.rel (%p207) target = $region28
        $region27: #{tpu_custom_call.1} parent=11 // pred_region
          _
        $region28: #{tpu_custom_call.1} parent=11 // pred_fallthru
          _
      $region12: #{tpu_custom_call.1} parent=5 // pred_fallthru
        _
      %p210 = scmp.lt.s32.totalorder %s19, 2
      // Predicated region
      $region29: #{tpu_custom_call.1} parent=5 // pred_check
        %p211 = pneg %p210
      $region30: #{tpu_custom_call.1} parent=5 // pred_check_branch
        %213 = sbr.rel (%p211) target = $region32
      $region31: #{tpu_custom_call.1} parent=5 // pred_region
        // Predicated region
        $region33: #{tpu_custom_call.1} parent=31 // pred_check
          %p214 = pneg %p39
        $region34: #{tpu_custom_call.1} parent=31 // pred_check_branch
          %216 = sbr.rel (%p214) target = $region36
        $region35: #{tpu_custom_call.1} parent=31 // pred_region
          %s217 = sand.u32 %s29, 1
          %s218 = scalar_lea.sflag [#allocation3], %s217
          %s219 = sand.u32 %s29, 1
          %s220 = smul.addr %s219, 8
          %s221 = scalar_lea.vmem [#allocation2], %s220
          %s223 = ssub.s32 128, 128
          %224 = vsyncadd %s218, %s223
          %s225 = smul.addr %s19, 128
          %s226 = scalar_lea.hbm %s0, %s225
          %s228 = sshll.u32 %s221, 4
          %s229 = int_to_ptr.vmem [resolvable:$true] %s228
          %231 = dma.hbm_to_vmem [thread:$0]  %s226, 128, %s229, %s218
        $region36: #{tpu_custom_call.1} parent=31 // pred_fallthru
          _
      $region32: #{tpu_custom_call.1} parent=5 // pred_fallthru
        _
      %p232 = scmp.le.s32.totalorder 1, %s19
      %p233 = scmp.lt.s32.totalorder %s19, 3
      %p234 = pnand %p232, %p233
      %p235 = pneg %p234
      // Predicated region
      $region37: #{tpu_custom_call.1} parent=5 // pred_check
        _
      $region38: #{tpu_custom_call.1} parent=5 // pred_check_branch
        %237 = sbr.rel (%p234) target = $region40
      $region39: #{tpu_custom_call.1} parent=5 // pred_region
        %s238 = ssub.s32 %s19, 1
        %s239 = sand.u32 %s32, 1
        %s240 = scalar_lea.sflag [#allocation3], %s239
        %s241 = sand.u32 %s32, 1
        %s242 = smul.addr %s241, 8
        %s243 = scalar_lea.vmem [#allocation2], %s242
        // Predicated region
        $region41: #{tpu_custom_call.1} parent=39 // pred_check
          %p244 = pneg %p45
        $region42: #{tpu_custom_call.1} parent=39 // pred_check_branch
          %246 = sbr.rel (%p244) target = $region44
        $region43: #{tpu_custom_call.1} parent=39 // pred_region
          %247 = dma.done %s240, 128
        $region44: #{tpu_custom_call.1} parent=39 // pred_fallthru
          _
        // Predicated region
        $region45: #{tpu_custom_call.1} parent=39 // pred_check
          %p248 = pneg %p66
        $region46: #{tpu_custom_call.1} parent=39 // pred_check_branch
          %250 = sbr.rel (%p248) target = $region48
        $region47: #{tpu_custom_call.1} parent=39 // pred_region
          %251 = dma.done [#allocation6], 8192
        $region48: #{tpu_custom_call.1} parent=39 // pred_fallthru
          _
        // Predicated region
        $region49: #{tpu_custom_call.1} parent=39 // pred_check
          %p252 = pneg %p87
        $region50: #{tpu_custom_call.1} parent=39 // pred_check_branch
          %254 = sbr.rel (%p252) target = $region52
        $region51: #{tpu_custom_call.1} parent=39 // pred_region
          %255 = dma.done [#allocation6], 64
        $region52: #{tpu_custom_call.1} parent=39 // pred_fallthru
          _
        // Predicated region
        $region53: #{tpu_custom_call.1} parent=39 // pred_check
          %p256 = pneg %p108
        $region54: #{tpu_custom_call.1} parent=39 // pred_check_branch
          %258 = sbr.rel (%p256) target = $region56
        $region55: #{tpu_custom_call.1} parent=39 // pred_region
          %259 = dma.done [#allocation9], 8192
        $region56: #{tpu_custom_call.1} parent=39 // pred_fallthru
          _
        %s260 = sand.u32 %s32, 1
        %s261 = scalar_lea.sflag [#allocation3], %s260
        %s262 = sand.u32 %s32, 1
        %s263 = smul.addr %s262, 8
        %s264 = scalar_lea.vmem [#allocation2], %s263
        %p265 = pneg %p45
        %p266 = pneg %p42
        %p267 = pneg %p66
        %p268 = pneg %p63
        %p269 = pneg %p87
        %p270 = pneg %p84
        %p271 = pneg %p108
        %p272 = pneg %p105
        %p273 = pneg %p129
        %p274 = pneg %p126
        %p275 = pneg %p155
        %p276 = pneg %p152
        %s277 = sand.u32 %s142, 1
        %s278 = scalar_lea.sflag [#allocation4], %s277
        %s279 = sand.u32 %s142, 1
        %s280 = smul.addr %s279, 8
        %s281 = scalar_lea.vmem [#allocation10], %s280
        %v282 = vld [vmem:[%s243] sm:$0xff]
        %v283 = vld [vmem:[#allocation5] sm:$0xff]
        %v284 = vld [vmem:[#allocation5 + $0x8] sm:$0xff]
        %v285 = vld [vmem:[#allocation5 + $0x10] sm:$0xff]
        %v286 = vld [vmem:[#allocation5 + $0x18] sm:$0xff]
        %v287 = vld [vmem:[#allocation5 + $0x20] sm:$0xff]
        %v288 = vld [vmem:[#allocation5 + $0x28] sm:$0xff]
        %v289 = vld [vmem:[#allocation5 + $0x30] sm:$0xff]
        %v290 = vld [vmem:[#allocation5 + $0x38] sm:$0xff]
        %v291 = vld [vmem:[#allocation5 + $0x40] sm:$0xff]
        %v292 = vld [vmem:[#allocation5 + $0x48] sm:$0xff]
        %v293 = vld [vmem:[#allocation5 + $0x50] sm:$0xff]
        %v294 = vld [vmem:[#allocation5 + $0x58] sm:$0xff]
        %v295 = vld [vmem:[#allocation5 + $0x60] sm:$0xff]
        %v296 = vld [vmem:[#allocation5 + $0x68] sm:$0xff]
        %v297 = vld [vmem:[#allocation5 + $0x70] sm:$0xff]
        %v298 = vld [vmem:[#allocation5 + $0x78] sm:$0xff]
        %v299 = vld [vmem:[#allocation5 + $0x80] sm:$0xff]
        %v300 = vld [vmem:[#allocation5 + $0x88] sm:$0xff]
        %v301 = vld [vmem:[#allocation5 + $0x90] sm:$0xff]
        %v302 = vld [vmem:[#allocation5 + $0x98] sm:$0xff]
        %v303 = vld [vmem:[#allocation5 + $0xa0] sm:$0xff]
        %v304 = vld [vmem:[#allocation5 + $0xa8] sm:$0xff]
        %v305 = vld [vmem:[#allocation5 + $0xb0] sm:$0xff]
        %v306 = vld [vmem:[#allocation5 + $0xb8] sm:$0xff]
        %v307 = vld [vmem:[#allocation5 + $0xc0] sm:$0xff]
        %v308 = vld [vmem:[#allocation5 + $0xc8] sm:$0xff]
        %v309 = vld [vmem:[#allocation5 + $0xd0] sm:$0xff]
        %v310 = vld [vmem:[#allocation5 + $0xd8] sm:$0xff]
        %v311 = vld [vmem:[#allocation5 + $0xe0] sm:$0xff]
        %v312 = vld [vmem:[#allocation5 + $0xe8] sm:$0xff]
        %v313 = vld [vmem:[#allocation5 + $0xf0] sm:$0xff]
        %v314 = vld [vmem:[#allocation5 + $0xf8] sm:$0xff]
        %v315 = vld [vmem:[#allocation5 + $0x100] sm:$0xff]
        %v316 = vld [vmem:[#allocation5 + $0x108] sm:$0xff]
        %v317 = vld [vmem:[#allocation5 + $0x110] sm:$0xff]
        %v318 = vld [vmem:[#allocation5 + $0x118] sm:$0xff]
        %v319 = vld [vmem:[#allocation5 + $0x120] sm:$0xff]
        %v320 = vld [vmem:[#allocation5 + $0x128] sm:$0xff]
        %v321 = vld [vmem:[#allocation5 + $0x130] sm:$0xff]
        %v322 = vld [vmem:[#allocation5 + $0x138] sm:$0xff]
        %v323 = vld [vmem:[#allocation5 + $0x140] sm:$0xff]
        %v324 = vld [vmem:[#allocation5 + $0x148] sm:$0xff]
        %v325 = vld [vmem:[#allocation5 + $0x150] sm:$0xff]
        %v326 = vld [vmem:[#allocation5 + $0x158] sm:$0xff]
        %v327 = vld [vmem:[#allocation5 + $0x160] sm:$0xff]
        %v328 = vld [vmem:[#allocation5 + $0x168] sm:$0xff]
        %v329 = vld [vmem:[#allocation5 + $0x170] sm:$0xff]
        %v330 = vld [vmem:[#allocation5 + $0x178] sm:$0xff]
        %v331 = vld [vmem:[#allocation5 + $0x180] sm:$0xff]
        %v332 = vld [vmem:[#allocation5 + $0x188] sm:$0xff]
        %v333 = vld [vmem:[#allocation5 + $0x190] sm:$0xff]
        %v334 = vld [vmem:[#allocation5 + $0x198] sm:$0xff]
        %v335 = vld [vmem:[#allocation5 + $0x1a0] sm:$0xff]
        %v336 = vld [vmem:[#allocation5 + $0x1a8] sm:$0xff]
        %v337 = vld [vmem:[#allocation5 + $0x1b0] sm:$0xff]
        %v338 = vld [vmem:[#allocation5 + $0x1b8] sm:$0xff]
        %v339 = vld [vmem:[#allocation5 + $0x1c0] sm:$0xff]
        %v340 = vld [vmem:[#allocation5 + $0x1c8] sm:$0xff]
        %v341 = vld [vmem:[#allocation5 + $0x1d0] sm:$0xff]
        %v342 = vld [vmem:[#allocation5 + $0x1d8] sm:$0xff]
        %v343 = vld [vmem:[#allocation5 + $0x1e0] sm:$0xff]
        %v344 = vld [vmem:[#allocation5 + $0x1e8] sm:$0xff]
        %v345 = vld [vmem:[#allocation5 + $0x1f0] sm:$0xff]
        %v346 = vld [vmem:[#allocation5 + $0x1f8] sm:$0xff]
        %v347 = vld [vmem:[#allocation7] sm:$0xf]
        %v349 = vlaneseq
        %v350 = vshrl.u32 %v349, 7
        %v351 = vsub.s32 0, %v350
        %v352 = vrot.slane %v347, %v351
        %v353 = vlaneseq
        %v354 = vshrl.u32 %v353, 7
        %v355 = vsub.s32 1, %v354
        %v356 = vrot.slane %v347, %v355
        %v357 = vlaneseq
        %v358 = vshrl.u32 %v357, 7
        %v359 = vsub.s32 2, %v358
        %v360 = vrot.slane %v347, %v359
        %v361 = vlaneseq
        %v362 = vshrl.u32 %v361, 7
        %v363 = vsub.s32 3, %v362
        %v364 = vrot.slane %v347, %v363
        %369 = vmatprep.subr.mxu0 %v344
        %370 = vmatpush1.msra.mxu0 %v343
        %371 = vmatprep.subr.mxu0 %v340
        %372 = vmatpush1.msra.mxu0 %v339
        %373 = vmatprep.subr.mxu0 %v336
        %374 = vmatpush1.msra.mxu0 %v335
        %375 = vmatprep.subr.mxu0 %v332
        %376 = vmatpush1.msra.mxu0 %v331
        %377 = vmatprep.subr.mxu0 %v328
        %378 = vmatpush1.msra.mxu0 %v327
        %379 = vmatprep.subr.mxu0 %v324
        %380 = vmatpush1.msra.mxu0 %v323
        %381 = vmatprep.subr.mxu0 %v320
        %382 = vmatpush1.msra.mxu0 %v319
        %383 = vmatprep.subr.mxu0 %v316
        %384 = vmatpush1.msra.mxu0 %v315
        %385 = vmatprep.subr.mxu0 %v312
        %386 = vmatpush1.msra.mxu0 %v311
        %387 = vmatprep.subr.mxu0 %v308
        %388 = vmatpush1.msra.mxu0 %v307
        %389 = vmatprep.subr.mxu0 %v304
        %390 = vmatpush1.msra.mxu0 %v303
        %391 = vmatprep.subr.mxu0 %v300
        %392 = vmatpush1.msra.mxu0 %v299
        %393 = vmatprep.subr.mxu0 %v296
        %394 = vmatpush1.msra.mxu0 %v295
        %395 = vmatprep.subr.mxu0 %v292
        %396 = vmatpush1.msra.mxu0 %v291
        %397 = vmatprep.subr.mxu0 %v288
        %398 = vmatpush1.msra.mxu0 %v287
        %399 = vmatprep.subr.mxu0 %v284
        %400 = vmatpush1.msra.mxu0 %v283
        %401 = vmatprep.subr.mxu0 0.0
        %402 = vmatpush2.msra.mxu0 0.0
        %403 = vmatprep.subr.mxu0 0.0
        %404 = vmatpush2.msra.mxu0 0.0
        %405 = vmatprep.subr.mxu0 0.0
        %406 = vmatpush2.msra.mxu0 0.0
        %407 = vmatprep.subr.mxu0 0.0
        %408 = vmatpush2.msra.mxu0 0.0
        %409 = vmatprep.subr.mxu0 0.0
        %410 = vmatpush2.msra.mxu0 0.0
        %411 = vmatprep.subr.mxu0 0.0
        %412 = vmatpush2.msra.mxu0 0.0
        %413 = vmatprep.subr.mxu0 0.0
        %414 = vmatpush2.msra.mxu0 0.0
        %415 = vmatprep.subr.mxu0 0.0
        %416 = vmatpush2.msra.mxu0 0.0
        %417 = vmatprep.subr.mxu0 0.0
        %418 = vmatpush2.msra.mxu0 0.0
        %419 = vmatprep.subr.mxu0 0.0
        %420 = vmatpush2.msra.mxu0 0.0
        %421 = vmatprep.subr.mxu0 0.0
        %422 = vmatpush2.msra.mxu0 0.0
        %423 = vmatprep.subr.mxu0 0.0
        %424 = vmatpush2.msra.mxu0 0.0
        %425 = vmatprep.subr.mxu0 0.0
        %426 = vmatpush2.msra.mxu0 0.0
        %427 = vmatprep.subr.mxu0 0.0
        %428 = vmatpush2.msra.mxu0 0.0
        %429 = vmatprep.subr.mxu0 0.0
        %430 = vmatpush2.msra.mxu0 0.0
        %431 = vmatprep.subr.mxu0 0.0
        %432 = vmatpush2.msra.mxu0 0.0
        %433 = vmatprep.mubr.f32.mxu0 0.0
        %434 = vmatmul.mubr.f32.gmra.mxu0 %v282
        %v435 = vpop.f32.mrf.mxu0
        %v436 = vadd.f32 %v352, %v435
        %v437 = vpop.f32.mrf.mxu0
        %v438 = vadd.f32 %v356, %v437
        %439 = vdwg.mxu0
        %440 = vmatprep.subr.mxu0 %v346
        %441 = vmatpush1.msra.mxu0 %v345
        %442 = vmatprep.subr.mxu0 %v342
        %443 = vmatpush1.msra.mxu0 %v341
        %444 = vmatprep.subr.mxu0 %v338
        %445 = vmatpush1.msra.mxu0 %v337
        %446 = vmatprep.subr.mxu0 %v334
        %447 = vmatpush1.msra.mxu0 %v333
        %448 = vmatprep.subr.mxu0 %v330
        %449 = vmatpush1.msra.mxu0 %v329
        %450 = vmatprep.subr.mxu0 %v326
        %451 = vmatpush1.msra.mxu0 %v325
        %452 = vmatprep.subr.mxu0 %v322
        %453 = vmatpush1.msra.mxu0 %v321
        %454 = vmatprep.subr.mxu0 %v318
        %455 = vmatpush1.msra.mxu0 %v317
        %456 = vmatprep.subr.mxu0 %v314
        %457 = vmatpush1.msra.mxu0 %v313
        %458 = vmatprep.subr.mxu0 %v310
        %459 = vmatpush1.msra.mxu0 %v309
        %460 = vmatprep.subr.mxu0 %v306
        %461 = vmatpush1.msra.mxu0 %v305
        %462 = vmatprep.subr.mxu0 %v302
        %463 = vmatpush1.msra.mxu0 %v301
        %464 = vmatprep.subr.mxu0 %v298
        %465 = vmatpush1.msra.mxu0 %v297
        %466 = vmatprep.subr.mxu0 %v294
        %467 = vmatpush1.msra.mxu0 %v293
        %468 = vmatprep.subr.mxu0 %v290
        %469 = vmatpush1.msra.mxu0 %v289
        %470 = vmatprep.subr.mxu0 %v286
        %471 = vmatpush1.msra.mxu0 %v285
        %472 = vmatprep.subr.mxu0 0.0
        %473 = vmatpush2.msra.mxu0 0.0
        %474 = vmatprep.subr.mxu0 0.0
        %475 = vmatpush2.msra.mxu0 0.0
        %476 = vmatprep.subr.mxu0 0.0
        %477 = vmatpush2.msra.mxu0 0.0
        %478 = vmatprep.subr.mxu0 0.0
        %479 = vmatpush2.msra.mxu0 0.0
        %480 = vmatprep.subr.mxu0 0.0
        %481 = vmatpush2.msra.mxu0 0.0
        %482 = vmatprep.subr.mxu0 0.0
        %483 = vmatpush2.msra.mxu0 0.0
        %484 = vmatprep.subr.mxu0 0.0
        %485 = vmatpush2.msra.mxu0 0.0
        %486 = vmatprep.subr.mxu0 0.0
        %487 = vmatpush2.msra.mxu0 0.0
        %488 = vmatprep.subr.mxu0 0.0
        %489 = vmatpush2.msra.mxu0 0.0
        %490 = vmatprep.subr.mxu0 0.0
        %491 = vmatpush2.msra.mxu0 0.0
        %492 = vmatprep.subr.mxu0 0.0
        %493 = vmatpush2.msra.mxu0 0.0
        %494 = vmatprep.subr.mxu0 0.0
        %495 = vmatpush2.msra.mxu0 0.0
        %496 = vmatprep.subr.mxu0 0.0
        %497 = vmatpush2.msra.mxu0 0.0
        %498 = vmatprep.subr.mxu0 0.0
        %499 = vmatpush2.msra.mxu0 0.0
        %500 = vmatprep.subr.mxu0 0.0
        %501 = vmatpush2.msra.mxu0 0.0
        %502 = vmatprep.subr.mxu0 0.0
        %503 = vmatpush2.msra.mxu0 0.0
        %504 = vmatprep.mubr.f32.mxu0 0.0
        %505 = vmatmul.mubr.f32.gmra.mxu0 %v282
        %v506 = vpop.f32.mrf.mxu0
        %v507 = vadd.f32 %v360, %v506
        %v508 = vpop.f32.mrf.mxu0
        %v509 = vadd.f32 %v364, %v508
        %510 = vdwg.mxu0
        %v511 = vmul.f32 %v436, 0.035677407
        %v512 = vmul.f32 %v438, 0.035677407
        %v513 = vmul.f32 %v507, 0.035677407
        %v514 = vmul.f32 %v509, 0.035677407
        %v515 = vmul.f32 %v511, %v436
        %v516 = vmul.f32 %v512, %v438
        %v517 = vmul.f32 %v513, %v507
        %v518 = vmul.f32 %v514, %v509
        %v519 = vadd.f32 %v515, 0.7978846
        %v520 = vadd.f32 %v516, 0.7978846
        %v521 = vadd.f32 %v517, 0.7978846
        %v522 = vadd.f32 %v518, 0.7978846
        %v523 = vmul.f32 %v436, %v519
        %v524 = vmul.f32 %v438, %v520
        %v525 = vmul.f32 %v507, %v521
        %v526 = vmul.f32 %v509, %v522
        %v527 = vtanh.pop %v523
        %v528 = vtanh.pop %v524
        %v529 = vtanh.pop %v525
        %v530 = vtanh.pop %v526
        %v531 = vmul.f32 %v436, 0.5
        %v532 = vmul.f32 %v438, 0.5
        %v533 = vmul.f32 %v507, 0.5
        %v534 = vmul.f32 %v509, 0.5
        %v535 = vmul.f32 %v531, %v527
        %v536 = vmul.f32 %v532, %v528
        %v537 = vmul.f32 %v533, %v529
        %v538 = vmul.f32 %v534, %v530
        %v539 = vadd.f32 %v531, %v535
        %v540 = vadd.f32 %v532, %v536
        %v541 = vadd.f32 %v533, %v537
        %v542 = vadd.f32 %v534, %v538
        %v543 = vld [vmem:[#allocation8] sm:$0xff]
        %v544 = vld [vmem:[#allocation8 + $0x8] sm:$0xff]
        %v545 = vld [vmem:[#allocation8 + $0x10] sm:$0xff]
        %v546 = vld [vmem:[#allocation8 + $0x18] sm:$0xff]
        %v547 = vld [vmem:[#allocation8 + $0x20] sm:$0xff]
        %v548 = vld [vmem:[#allocation8 + $0x28] sm:$0xff]
        %v549 = vld [vmem:[#allocation8 + $0x30] sm:$0xff]
        %v550 = vld [vmem:[#allocation8 + $0x38] sm:$0xff]
        %v551 = vld [vmem:[#allocation8 + $0x40] sm:$0xff]
        %v552 = vld [vmem:[#allocation8 + $0x48] sm:$0xff]
        %v553 = vld [vmem:[#allocation8 + $0x50] sm:$0xff]
        %v554 = vld [vmem:[#allocation8 + $0x58] sm:$0xff]
        %v555 = vld [vmem:[#allocation8 + $0x60] sm:$0xff]
        %v556 = vld [vmem:[#allocation8 + $0x68] sm:$0xff]
        %v557 = vld [vmem:[#allocation8 + $0x70] sm:$0xff]
        %v558 = vld [vmem:[#allocation8 + $0x78] sm:$0xff]
        %v559 = vld [vmem:[#allocation8 + $0x80] sm:$0xff]
        %v560 = vld [vmem:[#allocation8 + $0x88] sm:$0xff]
        %v561 = vld [vmem:[#allocation8 + $0x90] sm:$0xff]
        %v562 = vld [vmem:[#allocation8 + $0x98] sm:$0xff]
        %v563 = vld [vmem:[#allocation8 + $0xa0] sm:$0xff]
        %v564 = vld [vmem:[#allocation8 + $0xa8] sm:$0xff]
        %v565 = vld [vmem:[#allocation8 + $0xb0] sm:$0xff]
        %v566 = vld [vmem:[#allocation8 + $0xb8] sm:$0xff]
        %v567 = vld [vmem:[#allocation8 + $0xc0] sm:$0xff]
        %v568 = vld [vmem:[#allocation8 + $0xc8] sm:$0xff]
        %v569 = vld [vmem:[#allocation8 + $0xd0] sm:$0xff]
        %v570 = vld [vmem:[#allocation8 + $0xd8] sm:$0xff]
        %v571 = vld [vmem:[#allocation8 + $0xe0] sm:$0xff]
        %v572 = vld [vmem:[#allocation8 + $0xe8] sm:$0xff]
        %v573 = vld [vmem:[#allocation8 + $0xf0] sm:$0xff]
        %v574 = vld [vmem:[#allocation8 + $0xf8] sm:$0xff]
        %v575 = vld [vmem:[#allocation8 + $0x100] sm:$0xff]
        %v576 = vld [vmem:[#allocation8 + $0x108] sm:$0xff]
        %v577 = vld [vmem:[#allocation8 + $0x110] sm:$0xff]
        %v578 = vld [vmem:[#allocation8 + $0x118] sm:$0xff]
        %v579 = vld [vmem:[#allocation8 + $0x120] sm:$0xff]
        %v580 = vld [vmem:[#allocation8 + $0x128] sm:$0xff]
        %v581 = vld [vmem:[#allocation8 + $0x130] sm:$0xff]
        %v582 = vld [vmem:[#allocation8 + $0x138] sm:$0xff]
        %v583 = vld [vmem:[#allocation8 + $0x140] sm:$0xff]
        %v584 = vld [vmem:[#allocation8 + $0x148] sm:$0xff]
        %v585 = vld [vmem:[#allocation8 + $0x150] sm:$0xff]
        %v586 = vld [vmem:[#allocation8 + $0x158] sm:$0xff]
        %v587 = vld [vmem:[#allocation8 + $0x160] sm:$0xff]
        %v588 = vld [vmem:[#allocation8 + $0x168] sm:$0xff]
        %v589 = vld [vmem:[#allocation8 + $0x170] sm:$0xff]
        %v590 = vld [vmem:[#allocation8 + $0x178] sm:$0xff]
        %v591 = vld [vmem:[#allocation8 + $0x180] sm:$0xff]
        %v592 = vld [vmem:[#allocation8 + $0x188] sm:$0xff]
        %v593 = vld [vmem:[#allocation8 + $0x190] sm:$0xff]
        %v594 = vld [vmem:[#allocation8 + $0x198] sm:$0xff]
        %v595 = vld [vmem:[#allocation8 + $0x1a0] sm:$0xff]
        %v596 = vld [vmem:[#allocation8 + $0x1a8] sm:$0xff]
        %v597 = vld [vmem:[#allocation8 + $0x1b0] sm:$0xff]
        %v598 = vld [vmem:[#allocation8 + $0x1b8] sm:$0xff]
        %v599 = vld [vmem:[#allocation8 + $0x1c0] sm:$0xff]
        %v600 = vld [vmem:[#allocation8 + $0x1c8] sm:$0xff]
        %v601 = vld [vmem:[#allocation8 + $0x1d0] sm:$0xff]
        %v602 = vld [vmem:[#allocation8 + $0x1d8] sm:$0xff]
        %v603 = vld [vmem:[#allocation8 + $0x1e0] sm:$0xff]
        %v604 = vld [vmem:[#allocation8 + $0x1e8] sm:$0xff]
        %v605 = vld [vmem:[#allocation8 + $0x1f0] sm:$0xff]
        %v606 = vld [vmem:[#allocation8 + $0x1f8] sm:$0xff]
        %v607 = vld [vmem:[%s4] sm:$0x1]
        %v609 = vlaneseq
        %v610 = vshrl.u32 %v609, 7
        %v611 = vsub.s32 0, %v610
        %v612 = vrot.slane %v607, %v611
        %614 = vmatprep.subr.mxu0 0.0
        %615 = vmatpush1.msra.mxu0 %v558
        %616 = vmatprep.subr.mxu0 0.0
        %617 = vmatpush1.msra.mxu0 %v557
        %618 = vmatprep.subr.mxu0 0.0
        %619 = vmatpush1.msra.mxu0 %v556
        %620 = vmatprep.subr.mxu0 0.0
        %621 = vmatpush1.msra.mxu0 %v555
        %622 = vmatprep.subr.mxu0 0.0
        %623 = vmatpush1.msra.mxu0 %v554
        %624 = vmatprep.subr.mxu0 0.0
        %625 = vmatpush1.msra.mxu0 %v553
        %626 = vmatprep.subr.mxu0 0.0
        %627 = vmatpush1.msra.mxu0 %v552
        %628 = vmatprep.subr.mxu0 0.0
        %629 = vmatpush1.msra.mxu0 %v551
        %630 = vmatprep.subr.mxu0 0.0
        %631 = vmatpush1.msra.mxu0 %v550
        %632 = vmatprep.subr.mxu0 0.0
        %633 = vmatpush1.msra.mxu0 %v549
        %634 = vmatprep.subr.mxu0 0.0
        %635 = vmatpush1.msra.mxu0 %v548
        %636 = vmatprep.subr.mxu0 0.0
        %637 = vmatpush1.msra.mxu0 %v547
        %638 = vmatprep.subr.mxu0 0.0
        %639 = vmatpush1.msra.mxu0 %v546
        %640 = vmatprep.subr.mxu0 0.0
        %641 = vmatpush1.msra.mxu0 %v545
        %642 = vmatprep.subr.mxu0 0.0
        %643 = vmatpush1.msra.mxu0 %v544
        %644 = vmatprep.subr.mxu0 0.0
        %645 = vmatpush1.msra.mxu0 %v543
        %646 = vmatprep.subr.mxu0 0.0
        %647 = vmatpush2.msra.mxu0 %v574
        %648 = vmatprep.subr.mxu0 0.0
        %649 = vmatpush2.msra.mxu0 %v573
        %650 = vmatprep.subr.mxu0 0.0
        %651 = vmatpush2.msra.mxu0 %v572
        %652 = vmatprep.subr.mxu0 0.0
        %653 = vmatpush2.msra.mxu0 %v571
        %654 = vmatprep.subr.mxu0 0.0
        %655 = vmatpush2.msra.mxu0 %v570
        %656 = vmatprep.subr.mxu0 0.0
        %657 = vmatpush2.msra.mxu0 %v569
        %658 = vmatprep.subr.mxu0 0.0
        %659 = vmatpush2.msra.mxu0 %v568
        %660 = vmatprep.subr.mxu0 0.0
        %661 = vmatpush2.msra.mxu0 %v567
        %662 = vmatprep.subr.mxu0 0.0
        %663 = vmatpush2.msra.mxu0 %v566
        %664 = vmatprep.subr.mxu0 0.0
        %665 = vmatpush2.msra.mxu0 %v565
        %666 = vmatprep.subr.mxu0 0.0
        %667 = vmatpush2.msra.mxu0 %v564
        %668 = vmatprep.subr.mxu0 0.0
        %669 = vmatpush2.msra.mxu0 %v563
        %670 = vmatprep.subr.mxu0 0.0
        %671 = vmatpush2.msra.mxu0 %v562
        %672 = vmatprep.subr.mxu0 0.0
        %673 = vmatpush2.msra.mxu0 %v561
        %674 = vmatprep.subr.mxu0 0.0
        %675 = vmatpush2.msra.mxu0 %v560
        %676 = vmatprep.subr.mxu0 0.0
        %677 = vmatpush2.msra.mxu0 %v559
        %678 = vmatprep.mubr.f32.mxu0 %v540
        %679 = vmatmul.mubr.f32.gmra.mxu0 %v539
        %v680 = vpop.f32.mrf.mxu0
        %v681 = vadd.f32 %v612, %v680
        %v682 = vpop.f32.mrf.mxu0
        %683 = vdwg.mxu0
        %684 = vmatprep.subr.mxu0 0.0
        %685 = vmatpush1.msra.mxu0 %v590
        %686 = vmatprep.subr.mxu0 0.0
        %687 = vmatpush1.msra.mxu0 %v589
        %688 = vmatprep.subr.mxu0 0.0
        %689 = vmatpush1.msra.mxu0 %v588
        %690 = vmatprep.subr.mxu0 0.0
        %691 = vmatpush1.msra.mxu0 %v587
        %692 = vmatprep.subr.mxu0 0.0
        %693 = vmatpush1.msra.mxu0 %v586
        %694 = vmatprep.subr.mxu0 0.0
        %695 = vmatpush1.msra.mxu0 %v585
        %696 = vmatprep.subr.mxu0 0.0
        %697 = vmatpush1.msra.mxu0 %v584
        %698 = vmatprep.subr.mxu0 0.0
        %699 = vmatpush1.msra.mxu0 %v583
        %700 = vmatprep.subr.mxu0 0.0
        %701 = vmatpush1.msra.mxu0 %v582
        %702 = vmatprep.subr.mxu0 0.0
        %703 = vmatpush1.msra.mxu0 %v581
        %704 = vmatprep.subr.mxu0 0.0
        %705 = vmatpush1.msra.mxu0 %v580
        %706 = vmatprep.subr.mxu0 0.0
        %707 = vmatpush1.msra.mxu0 %v579
        %708 = vmatprep.subr.mxu0 0.0
        %709 = vmatpush1.msra.mxu0 %v578
        %710 = vmatprep.subr.mxu0 0.0
        %711 = vmatpush1.msra.mxu0 %v577
        %712 = vmatprep.subr.mxu0 0.0
        %713 = vmatpush1.msra.mxu0 %v576
        %714 = vmatprep.subr.mxu0 0.0
        %715 = vmatpush1.msra.mxu0 %v575
        %716 = vmatprep.subr.mxu0 0.0
        %717 = vmatpush2.msra.mxu0 %v606
        %718 = vmatprep.subr.mxu0 0.0
        %719 = vmatpush2.msra.mxu0 %v605
        %720 = vmatprep.subr.mxu0 0.0
        %721 = vmatpush2.msra.mxu0 %v604
        %722 = vmatprep.subr.mxu0 0.0
        %723 = vmatpush2.msra.mxu0 %v603
        %724 = vmatprep.subr.mxu0 0.0
        %725 = vmatpush2.msra.mxu0 %v602
        %726 = vmatprep.subr.mxu0 0.0
        %727 = vmatpush2.msra.mxu0 %v601
        %728 = vmatprep.subr.mxu0 0.0
        %729 = vmatpush2.msra.mxu0 %v600
        %730 = vmatprep.subr.mxu0 0.0
        %731 = vmatpush2.msra.mxu0 %v599
        %732 = vmatprep.subr.mxu0 0.0
        %733 = vmatpush2.msra.mxu0 %v598
        %734 = vmatprep.subr.mxu0 0.0
        %735 = vmatpush2.msra.mxu0 %v597
        %736 = vmatprep.subr.mxu0 0.0
        %737 = vmatpush2.msra.mxu0 %v596
        %738 = vmatprep.subr.mxu0 0.0
        %739 = vmatpush2.msra.mxu0 %v595
        %740 = vmatprep.subr.mxu0 0.0
        %741 = vmatpush2.msra.mxu0 %v594
        %742 = vmatprep.subr.mxu0 0.0
        %743 = vmatpush2.msra.mxu0 %v593
        %744 = vmatprep.subr.mxu0 0.0
        %745 = vmatpush2.msra.mxu0 %v592
        %746 = vmatprep.subr.mxu0 0.0
        %747 = vmatpush2.msra.mxu0 %v591
        %748 = vmatprep.mubr.f32.mxu0 %v542
        %749 = vmatmul.mubr.f32.gmra.mxu0 %v541
        %v750 = vpop.f32.mrf.mxu0
        %v751 = vadd.f32 %v681, %v750
        %v752 = vpop.f32.mrf.mxu0
        %753 = vdwg.mxu0
        %754 = vst [vmem:[%s281] sm:$0xff] %v751
        %s755 = sand.u32 %s142, 1
        %s756 = scalar_lea.sflag [#allocation4], %s755
        %s757 = sand.u32 %s142, 1
        %s758 = smul.addr %s757, 8
        %s759 = scalar_lea.vmem [#allocation10], %s758
        // Predicated region
        $region57: #{tpu_custom_call.1} parent=39 // pred_check
          %p760 = pneg %p152
        $region58: #{tpu_custom_call.1} parent=39 // pred_check_branch
          %762 = sbr.rel (%p760) target = $region60
        $region59: #{tpu_custom_call.1} parent=39 // pred_region
          %s764 = ssub.s32 128, 128
          %765 = vsyncadd %s756, %s764
          %s766 = smul.addr %s24, 128
          %s767 = scalar_lea.hbm %s5, %s766
          %s769 = sshll.u32 %s759, 4
          %s770 = int_to_ptr.vmem [resolvable:$true] %s769
          %772 = dma.vmem_to_hbm [thread:$0]  %s770, 128, %s767, %s756
        $region60: #{tpu_custom_call.1} parent=39 // pred_fallthru
          _
      $region40: #{tpu_custom_call.1} parent=5 // pred_fallthru
        _
      %p773 = scmp.le.s32.totalorder 2, %s19
      // Predicated region
      $region61: #{tpu_custom_call.1} parent=5 // pred_check
        %p774 = pneg %p773
      $region62: #{tpu_custom_call.1} parent=5 // pred_check_branch
        %776 = sbr.rel (%p774) target = $region64
      $region63: #{tpu_custom_call.1} parent=5 // pred_region
        %s777 = ssub.s32 %s19, 2
        // Predicated region
        $region65: #{tpu_custom_call.1} parent=63 // pred_check
          %p778 = pneg %p158
        $region66: #{tpu_custom_call.1} parent=63 // pred_check_branch
          %780 = sbr.rel (%p778) target = $region68
        $region67: #{tpu_custom_call.1} parent=63 // pred_region
          %s781 = sand.u32 %s143, 1
          %s782 = scalar_lea.sflag [#allocation4], %s781
          %s783 = sand.u32 %s143, 1
          %s784 = smul.addr %s783, 8
          %s785 = scalar_lea.vmem [#allocation10], %s784
          %786 = dma.done %s782, 128
        $region68: #{tpu_custom_call.1} parent=63 // pred_fallthru
          _
      $region64: #{tpu_custom_call.1} parent=5 // pred_fallthru
        _
    $region6: #{tpu_custom_call.1} parent=1 // loop_footer
      %s23 = sadd.s32 1, %s19
    $region7: #{tpu_custom_call.1} parent=1 // loop_footer_branch
      %18 = sbr.rel target = $region3
    $region8: #{tpu_custom_call.1} parent=1 // loop_exit
      _
    %787 = vsyncpa [#allocation3], 1
    %s788 = scalar_lea.sflag [#allocation3], 1
    %789 = vsyncpa %s788, 1
    %790 = vsyncpa [#allocation6], 1
    %791 = vsyncpa [#allocation9], 1
    %792 = vsyncpa [#allocation4], 1
    %s793 = scalar_lea.sflag [#allocation4], 1
    %794 = vsyncpa %s793, 1

</llo_original>
